<compile_context>
chip_gen: v7x
topology: tpu7x:2x2x1
jax: 0.10.0
libtpu: 0.0.40
codegen_flags: <defaults>
</compile_context>

<pallas_src>
import math

import numpy as np

import jax
import jax.numpy as jnp
from jax.experimental import pallas as pl
from jax.experimental.pallas import tpu as pltpu

_MiB = 1024 * 1024


def _spatial_dropout_kernel(x_ref, m_ref, o_ref):
    """x_ref/o_ref: (tm, W) tile; m_ref: (1, W) or (tm, W) f32 mask*scale."""
    o_ref[...] = (x_ref[...] * m_ref[...]).astype(o_ref.dtype)


def _lcm(a: int, b: int) -> int:
    return a * b // math.gcd(a, b)


def _round_up(a: int, b: int) -> int:
    return ((a + b - 1) // b) * b


def _vmem_capacity_bytes() -> int:
    """Physical VMEM capacity; conservative (v7x-sized) fallback."""
    try:
        cap = getattr(pltpu.get_tpu_info(), "vmem_capacity_bytes", None)
        if cap:
            return int(cap)
    except Exception:
        pass
    return 64 * _MiB


def _pick_lane_dense_width(N: int, H: int, itemsize: int, sub_mult: int,
                           budget: int):
    """Pick W = k*128 dividing N; minimise mask row-period P, prefer larger W."""
    best = None
    for k in range(1, 129):                       # W in [128, 16384]
        W = 128 * k
        if W > N or N % W:
            continue
        P = H // math.gcd(H, W)
        if _lcm(sub_mult, P) * W * itemsize > budget // 8:
            continue                              # minimum legal tile too big
        key = (P, -W)
        if best is None or key < best[0]:
            best = (key, W, P)
    if best is None:
        return None, None
    return best[1], best[2]


def spatial_dropout1d(x: jax.Array, key: jax.Array, p: float,
                      training: bool = True,
                      *, target_tile_bytes: int | None = None,
                      donate_input: bool = False) -> jax.Array:
    """JAX/Pallas equivalent of SpatialDropout1d.forward.

    x: (batch, seq, emb). Returns same shape/dtype. One keep/drop decision per
    embedding channel, shared across batch & sequence (faithful port of the
    permute + Dropout2d trick).  Set donate_input=True only if the caller
    donates x (otherwise XLA would insert a defensive copy).
    """
    if not (0.0 <= p <= 1.0):
        raise ValueError(f"dropout probability must be in [0, 1], got {p}")
    if (not training) or p == 0.0:
        return x                                   # nn.Dropout2d identity path

    B, S, H = x.shape
    dtype = x.dtype
    itemsize = x.dtype.itemsize
    N = B * S * H

    # Per-channel keep decision folded with the inverted-dropout scale.
    # Kept in f32 and multiplied in f32 (cast on store) -- closest to
    # PyTorch's float-scale dropout; p == 1.0 zeros everything.
    scale = 0.0 if p >= 1.0 else 1.0 / (1.0 - p)
    u = jax.random.uniform(key, (H,), dtype=jnp.float32)
    mask1d = jnp.where(u >= p, jnp.float32(scale), jnp.float32(0.0))   # (H,)

    # ---- generation-aware budgets ------------------------------------------
    vmem_budget = (3 * _vmem_capacity_bytes()) // 4     # ~48 MiB v7x, ~96 MiB v5e/v6e
    if target_tile_bytes is None:
        target_tile_bytes = 16 * _MiB if vmem_budget >= 80 * _MiB else 8 * _MiB
    sub_mult = max(8, 32 // itemsize)                   # 8 f32 / 16 bf16 / 32 int8

    # ---- lane-dense 2-D layout ----------------------------------------------
    P = 1
    if H % 128 == 0:
        W = H
    else:
        lcm_h = _lcm(H, 128)
        if N % lcm_h == 0 and lcm_h <= 16384:
            W = lcm_h                                   # single-row mask, P = 1
        elif N % 128 == 0:
            W, P = _pick_lane_dense_width(N, H, itemsize, sub_mult, vmem_budget)
            if W is None:
                W, P = H, 1
        else:
            W, P = H, 1
            # TODO(synk): lane-sparse fallback (masked vst); padding emb to a
            # multiple of 128 would cost an extra full HBM pass, so we accept it.

    R = N // W
    x2 = x.reshape(R, W)                                # contiguous reshape

    # ---- row-tile selection --------------------------------------------------
    align = _lcm(sub_mult, P)
    row_bytes = 2 * (2 * W * itemsize)                  # in + out, double-buffered
    if P > 1:
        row_bytes += 2 * W * 4                          # (tm, W) f32 mask buffers
    tm = min(max(1, target_tile_bytes // (W * itemsize)),
             max(1, (vmem_budget - 2 * _MiB) // row_bytes))
    # >= ~8 grid steps so the parallel axis shards across v7x's two TensorCores
    tm = min(tm, _round_up(pl.cdiv(R, 8), align))
    tm = max(align, (tm // align) * align)
    if tm >= R:
        tm = R                                          # single full-extent block

    grid = (pl.cdiv(R, tm),)

    # ---- mask block (fetched once: constant index_map) -----------------------
    if P == 1:
        mask_rows = 1
        mask_arr = jnp.tile(mask1d, W // H).reshape(1, W)
    else:
        # Blocks start at row multiples of P (or row 0 for a single block), so
        # channel of element (r, c) within a block is ((r*W + c) % H).
        mask_rows = tm
        row_off = (np.arange(mask_rows, dtype=np.int64) * (W % H)) % H
        ch = (jnp.asarray(row_off, dtype=jnp.int32)[:, None]
              + jnp.arange(W, dtype=jnp.int32)[None, :]) % H
        mask_arr = jnp.take(mask1d, ch)                 # (tm, W) f32

    y2 = pl.pallas_call(
        _spatial_dropout_kernel,
        out_shape=jax.ShapeDtypeStruct((R, W), dtype),
        grid=grid,
        in_specs=[
            pl.BlockSpec((tm, W), lambda i: (i, 0)),           # contiguous HBM slab
            pl.BlockSpec((mask_rows, W), lambda i: (0, 0)),    # mask, DMA'd once
        ],
        out_specs=pl.BlockSpec((tm, W), lambda i: (i, 0)),
        compiler_params=pltpu.CompilerParams(
            dimension_semantics=("parallel",),
            vmem_limit_bytes=int(vmem_budget),
        ),
        input_output_aliases=({0: 0} if donate_input else {}),
    )(x2, mask_arr)

    return y2.reshape(B, S, H)


if __name__ == "__main__":
    key = jax.random.PRNGKey(0)
    k_x, k_drop = jax.random.split(key)

    batch, seq, emb = 2, 8, 32
    p = 0.5

    x = jax.random.normal(k_x, (batch, seq, emb), dtype=jnp.float32)

    y = jax.block_until_ready(spatial_dropout1d(x, k_drop, p, training=True))

    # Reference: whole emb channels are either zeroed or scaled by 1/(1-p),
    # with the same mask shared across batch and sequence (same PRNG draw).
    u_ref = jax.random.uniform(k_drop, (emb,), dtype=jnp.float32)
    mask_ref = jnp.where(u_ref >= p, 1.0 / (1.0 - p), 0.0)
    y_ref = x * mask_ref[None, None, :]
    assert jnp.allclose(y, y_ref, atol=1e-6), "mismatch vs reference"

    # Eval mode is identity; p == 1.0 zeros everything (PyTorch-compatible).
    assert jnp.allclose(spatial_dropout1d(x, k_drop, p, training=False), x)
    y_all0 = jax.block_until_ready(spatial_dropout1d(x, k_drop, 1.0, training=True))
    assert jnp.allclose(y_all0, jnp.zeros_like(x))

    # Misaligned emb, lcm path: H=48, N=1536 -> W = lcm(48,128) = 384.
    b2, s2, e2 = 4, 8, 48
    x2 = jax.random.normal(k_x, (b2, s2, e2), dtype=jnp.float32)
    y2 = jax.block_until_ready(spatial_dropout1d(x2, k_drop, p, training=True))
    u2 = jax.random.uniform(k_drop, (e2,), dtype=jnp.float32)
    m2 = jnp.where(u2 >= p, 1.0 / (1.0 - p), 0.0)
    assert jnp.allclose(y2, x2 * m2[None, None, :], atol=1e-6)

    # Misaligned emb, periodic-mask path: H=1027 (odd), lcm(1027,128) > 16K,
    # N % 128 == 0 -> W = k*128 with row-periodic mask.
    b3, s3, e3 = 8, 16, 1027
    x3 = jax.random.normal(k_x, (b3, s3, e3), dtype=jnp.float32)
    y3 = jax.block_until_ready(spatial_dropout1d(x3, k_drop, p, training=True))
    u3 = jax.random.uniform(k_drop, (e3,), dtype=jnp.float32)
    m3 = jnp.where(u3 >= p, 1.0 / (1.0 - p), 0.0)
    assert jnp.allclose(y3, x3 * m3[None, None, :], atol=1e-6)

    print("KERNEL_OK")
</pallas_src>

<mosaic_0001>
module attributes {stable_mosaic.version = 11 : i64} {
  func.func @_spatial_dropout_kernel(%arg0: i32, %arg1: memref<4x128xf32, #tpu.memory_space<vmem>>, %arg2: memref<1x128xf32, #tpu.memory_space<vmem>>, %arg3: memref<4x128xf32, #tpu.memory_space<vmem>>) attributes {dimension_semantics = [#tpu.dimension_semantics<parallel>], iteration_bounds = array<i64: 1>, scalar_prefetch = 0 : i64, scratch_operands = 0 : i64, tpu.core_type = #tpu.core_type<tc>, window_params = [{transform_indices = @transform_0, window_bounds = array<i64: 4, 128>}, {pipeline_mode = #tpu.pipeline_mode<synchronous>, transform_indices = @transform_1, window_bounds = array<i64: 1, 128>}, {transform_indices = @transform_2, window_bounds = array<i64: 4, 128>}]} {
    %c0 = arith.constant 0 : index
    %c0_0 = arith.constant 0 : index
    %0 = vector.load %arg1[%c0, %c0_0] : memref<4x128xf32, #tpu.memory_space<vmem>>, vector<4x128xf32>
    %c0_1 = arith.constant 0 : index
    %c0_2 = arith.constant 0 : index
    %1 = vector.load %arg2[%c0_1, %c0_2] : memref<1x128xf32, #tpu.memory_space<vmem>>, vector<1x128xf32>
    %2 = vector.broadcast %1 : vector<1x128xf32> to vector<4x128xf32>
    %3 = arith.mulf %0, %2 : vector<4x128xf32>
    %c0_3 = arith.constant 0 : index
    %c0_4 = arith.constant 0 : index
    %4 = vector.load %arg3[%c0_3, %c0_4] : memref<4x128xf32, #tpu.memory_space<vmem>>, vector<4x128xf32>
    tpu.vector_store %arg3[%c0_3, %c0_4], %3 {strides = array<i32>} : memref<4x128xf32, #tpu.memory_space<vmem>>, vector<4x128xf32>,
    return
  }
  func.func @transform_0(%arg0: i32) -> (i32, i32) {
    %c0_i32 = arith.constant 0 : i32
    %c0_i32_0 = arith.constant 0 : i32
    return %arg0, %c0_i32 : i32, i32
  }
  func.func @transform_1(%arg0: i32) -> (i32, i32) {
    %c0_i32 = arith.constant 0 : i32
    %c0_i32_0 = arith.constant 0 : i32
    %c0_i32_1 = arith.constant 0 : i32
    return %c0_i32, %c0_i32_0 : i32, i32
  }
  func.func @transform_2(%arg0: i32) -> (i32, i32) {
    %c0_i32 = arith.constant 0 : i32
    %c0_i32_0 = arith.constant 0 : i32
    return %arg0, %c0_i32 : i32, i32
  }
}

</mosaic_0001>

<llo_original>
// kernel: tpu_custom_call.1
$region0: #{tpu_custom_call.1}
  #allocation0 [shape = 'u32[]', space=smem, size = 0x4, offset = 0x4, fixed_abs, tag = 'smem constant byte address 0x4 - core index']
  #allocation1 [shape = 'u32[144,128]{1,0:T(1,128)}', space=vmem, size = 0x12000, scoped, tag = 'internal scratch']
  %s0 = inlined_call_operand.hbm [shape: f32[4,128], index: 0, kind: input, shape index: {}]
  %s1 = inlined_call_operand.vmem [shape: f32[1,128], index: 1, kind: input, shape index: {}]
  %s2 = inlined_call_operand.hbm [shape: f32[4,128], index: 2, kind: output, shape index: {}]
  %s3 = sld [smem:[#allocation0]]
  $region22: #{tpu_custom_call.1} parent=0
    _
  %s5 = ssub.s32 1, %s3
  %s6 = scalar_select 0, %s5, %s3
  $region1: #{tpu_custom_call.1} parent=0
    #allocation2 [shape = 'u8[2048]{0}', space=vmem, size = 0x800, scoped, tag = 'input window, operand 0, single buffered']
    #allocation3 [shape = 's32[1]{0}', space=sflag, size = 0x4, scoped, tag = 'scoped memory for tpu_custom_call.1']
    #allocation4 [shape = 's32[1]{0}', space=sflag, size = 0x4, scoped, tag = 'scoped memory for tpu_custom_call.1']
    #allocation5 [shape = 'u8[2048]{0}', space=vmem, size = 0x800, scoped, tag = 'output window, operand 0, single buffered']
    %7 = vsyncpa [#allocation3], 0
    %8 = vsyncpa [#allocation4], 0
    // Predicated region
    $region2: #{tpu_custom_call.1} parent=1 // pred_check
      _
    $region3: #{tpu_custom_call.1} parent=1 // pred_check_branch
      %10 = sbr.rel (0) target = $region5
    $region4: #{tpu_custom_call.1} parent=1 // pred_region
      %s12 = ssub.s32 64, 64
      %13 = vsyncadd [#allocation3], %s12
      %s15 = sshll.u32 [#allocation2], 4
      %s16 = int_to_ptr.vmem [resolvable:$true] %s15
      %18 = dma.hbm_to_vmem [thread:$0]  %s0, 64, %s16, [#allocation3]
    $region5: #{tpu_custom_call.1} parent=1 // pred_fallthru
      _
    // Predicated region
    $region6: #{tpu_custom_call.1} parent=1 // pred_check
      _
    $region7: #{tpu_custom_call.1} parent=1 // pred_check_branch
      %20 = sbr.rel (0) target = $region9
    $region8: #{tpu_custom_call.1} parent=1 // pred_region
      _
    $region9: #{tpu_custom_call.1} parent=1 // pred_fallthru
      _
    // Predicated region
    $region10: #{tpu_custom_call.1} parent=1 // pred_check
      _
    $region11: #{tpu_custom_call.1} parent=1 // pred_check_branch
      %22 = sbr.rel (0) target = $region13
    $region12: #{tpu_custom_call.1} parent=1 // pred_region
      %23 = dma.done [#allocation3], 64
    $region13: #{tpu_custom_call.1} parent=1 // pred_fallthru
      _
    %v24 = vld [vmem:[#allocation2] sm:$0xf]
    %v25 = vld [vmem:[%s1] sm:$0x1]
    %v27 = vlaneseq
    %v28 = vshrl.u32 %v27, 7
    %v29 = vsub.s32 0, %v28
    %v30 = vrot.slane %v25, %v29
    %v32 = vmul.f32 %v24, %v30
    %33 = vst [vmem:[#allocation5] sm:$0xf] %v32
    // Predicated region
    $region14: #{tpu_custom_call.1} parent=1 // pred_check
      _
    $region15: #{tpu_custom_call.1} parent=1 // pred_check_branch
      %35 = sbr.rel (0) target = $region17
    $region16: #{tpu_custom_call.1} parent=1 // pred_region
      %s37 = ssub.s32 64, 64
      %38 = vsyncadd [#allocation4], %s37
      %s40 = sshll.u32 [#allocation5], 4
      %s41 = int_to_ptr.vmem [resolvable:$true] %s40
      %43 = dma.vmem_to_hbm [thread:$0]  %s41, 64, %s2, [#allocation4]
    $region17: #{tpu_custom_call.1} parent=1 // pred_fallthru
      _
    // Predicated region
    $region18: #{tpu_custom_call.1} parent=1 // pred_check
      _
    $region19: #{tpu_custom_call.1} parent=1 // pred_check_branch
      %45 = sbr.rel (0) target = $region21
    $region20: #{tpu_custom_call.1} parent=1 // pred_region
      %46 = dma.done [#allocation4], 64
    $region21: #{tpu_custom_call.1} parent=1 // pred_fallthru
      _
    %47 = vsyncpa [#allocation3], 1
    %48 = vsyncpa [#allocation4], 1

</llo_original>
